<compile_context>
chip_gen: v7x
topology: tpu7x:2x2x1
jax: 0.10.0
libtpu: 0.0.40
codegen_flags: <defaults>
</compile_context>

<pallas_src>
import jax
import jax.numpy as jnp
from jax.experimental import pallas as pl
from jax.experimental.pallas import tpu as pltpu

n_features = 3
_EPS = 1e-5


# --------------------------------------------------------------------------
# Kernels
# --------------------------------------------------------------------------
def _lin0_relu_kernel(z_ref, w_ref, b_ref, o_ref):
    h = jnp.dot(z_ref[...], w_ref[...], preferred_element_type=jnp.float32)
    o_ref[...] = jnp.maximum(h + b_ref[...], 0.0)


def _gblock_kernel(x_ref, wp_ref, bp_ref, wu_ref, bu_ref, w1_ref, b1_ref, o_ref):
    # x_ref : (1, L, Cin)  one batch element, channels-last
    # wp    : (Cin, Cout)          convp (ConvT k=1)
    # wu    : (4, Cin, Cout)       convu taps (ConvT k=4, s=2, p=1)
    # w1    : (3, Cout, Cout)      conv1 taps (ConvT k=3, s=1, p=1)
    # o_ref : (1, 2, L, Cout)      [even plane, odd plane] of the 2L output
    f32 = jnp.float32
    x = x_ref[0]                                   # (L, Cin)
    L = x.shape[0]

    # ---- convp (pointwise channel mix) ----
    p = jnp.dot(x, wp_ref[...], preferred_element_type=f32) + bp_ref[...]

    # ---- F.interpolate(scale=2, linear, align_corners=False), even/odd ----
    p_prev = jnp.concatenate([p[:1], p[:-1]], axis=0)     # edge-replicated p[m-1]
    p_next = jnp.concatenate([p[1:], p[-1:]], axis=0)     # edge-replicated p[m+1]
    y0_even = 0.75 * p + 0.25 * p_prev                    # output row 2m
    y0_odd = 0.75 * p + 0.25 * p_next                     # output row 2m+1

    # ---- convu: ConvTranspose1d(k=4, s=2, p=1) ----
    zrow_x = jnp.zeros_like(x[:1])
    x_prevz = jnp.concatenate([zrow_x, x[:-1]], axis=0)   # x[m-1], zero at m=0
    x_nextz = jnp.concatenate([x[1:], zrow_x], axis=0)    # x[m+1], zero at m=L-1
    u_even = (jnp.dot(x, wu_ref[1], preferred_element_type=f32)
              + jnp.dot(x_prevz, wu_ref[3], preferred_element_type=f32)
              + bu_ref[...])
    u_odd = (jnp.dot(x, wu_ref[2], preferred_element_type=f32)
             + jnp.dot(x_nextz, wu_ref[0], preferred_element_type=f32)
             + bu_ref[...])

    # ---- InstanceNorm1d(bnu) over full length (2L) per channel, then ReLU ----
    inv_n = 1.0 / (2 * L)
    mean_u = (jnp.sum(u_even, axis=0, keepdims=True)
              + jnp.sum(u_odd, axis=0, keepdims=True)) * inv_n
    var_u = (jnp.sum((u_even - mean_u) ** 2, axis=0, keepdims=True)
             + jnp.sum((u_odd - mean_u) ** 2, axis=0, keepdims=True)) * inv_n
    scale_u = jax.lax.rsqrt(var_u + _EPS)
    v_even = jnp.maximum((u_even - mean_u) * scale_u, 0.0)
    v_odd = jnp.maximum((u_odd - mean_u) * scale_u, 0.0)

    # ---- conv1: ConvTranspose1d(k=3, s=1, p=1) on interleaved v, even/odd ----
    # out[j] = v[j+1]@W0 + v[j]@W1 + v[j-1]@W2  (out-of-range v -> 0)
    zrow_v = jnp.zeros_like(v_even[:1])
    v_odd_prevz = jnp.concatenate([zrow_v, v_odd[:-1]], axis=0)    # v[2m-1]
    v_even_nextz = jnp.concatenate([v_even[1:], zrow_v], axis=0)   # v[2m+2]
    c_even = (jnp.dot(v_odd, w1_ref[0], preferred_element_type=f32)
              + jnp.dot(v_even, w1_ref[1], preferred_element_type=f32)
              + jnp.dot(v_odd_prevz, w1_ref[2], preferred_element_type=f32)
              + b1_ref[...])
    c_odd = (jnp.dot(v_even_nextz, w1_ref[0], preferred_element_type=f32)
             + jnp.dot(v_odd, w1_ref[1], preferred_element_type=f32)
             + jnp.dot(v_even, w1_ref[2], preferred_element_type=f32)
             + b1_ref[...])

    # ---- InstanceNorm1d(bn1) ----
    mean_c = (jnp.sum(c_even, axis=0, keepdims=True)
              + jnp.sum(c_odd, axis=0, keepdims=True)) * inv_n
    var_c = (jnp.sum((c_even - mean_c) ** 2, axis=0, keepdims=True)
             + jnp.sum((c_odd - mean_c) ** 2, axis=0, keepdims=True)) * inv_n
    scale_c = jax.lax.rsqrt(var_c + _EPS)
    n_even = (c_even - mean_c) * scale_c
    n_odd = (c_odd - mean_c) * scale_c

    # ---- residual add + ReLU; dense slab stores (interleave done in wrapper) ----
    o_ref[0, 0] = jnp.maximum(y0_even + n_even, 0.0)
    o_ref[0, 1] = jnp.maximum(y0_odd + n_odd, 0.0)


def _pointwise_tanh_kernel(x_ref, w_ref, b_ref, o_ref):
    y = jnp.dot(x_ref[0], w_ref[...], preferred_element_type=jnp.float32)
    o_ref[0] = jnp.tanh(y + b_ref[...])


# --------------------------------------------------------------------------
# Pallas wrappers
# --------------------------------------------------------------------------
def lin0_relu(z, w, b):
    B, K = z.shape
    N = w.shape[1]
    return pl.pallas_call(
        _lin0_relu_kernel,
        out_shape=jax.ShapeDtypeStruct((B, N), jnp.float32),
        grid_spec=pltpu.PrefetchScalarGridSpec(
            num_scalar_prefetch=0,
            grid=(1,),
            in_specs=[pl.BlockSpec((B, K), lambda i: (0, 0)),
                      pl.BlockSpec((K, N), lambda i: (0, 0)),
                      pl.BlockSpec((1, N), lambda i: (0, 0))],
            out_specs=pl.BlockSpec((B, N), lambda i: (0, 0))),
        compiler_params=pltpu.CompilerParams(dimension_semantics=("arbitrary",)),
    )(z, w, b)


def gblock(x, wp, bp, wu, bu, w1, b1):
    """x: (B, L, Cin) channels-last. Returns (B, 2L, Cout)."""
    B, L, Cin = x.shape
    Cout = wp.shape[1]
    out = pl.pallas_call(
        _gblock_kernel,
        out_shape=jax.ShapeDtypeStruct((B, 2, L, Cout), jnp.float32),
        grid_spec=pltpu.PrefetchScalarGridSpec(
            num_scalar_prefetch=0,
            grid=(B,),
            in_specs=[
                pl.BlockSpec((1, L, Cin), lambda b: (b, 0, 0)),
                pl.BlockSpec((Cin, Cout), lambda b: (0, 0)),       # resident weights
                pl.BlockSpec((1, Cout), lambda b: (0, 0)),
                pl.BlockSpec((4, Cin, Cout), lambda b: (0, 0, 0)),
                pl.BlockSpec((1, Cout), lambda b: (0, 0)),
                pl.BlockSpec((3, Cout, Cout), lambda b: (0, 0, 0)),
                pl.BlockSpec((1, Cout), lambda b: (0, 0)),
            ],
            out_specs=pl.BlockSpec((1, 2, L, Cout), lambda b: (b, 0, 0, 0))),
        compiler_params=pltpu.CompilerParams(dimension_semantics=("parallel",)),
    )(x, wp, bp, wu, bu, w1, b1)
    # interleave even/odd planes along the length axis (layout plumbing)
    return out.transpose(0, 2, 1, 3).reshape(B, 2 * L, Cout)


def pointwise_tanh(x, w, b):
    B, L, Cin = x.shape
    Cout = w.shape[1]
    return pl.pallas_call(
        _pointwise_tanh_kernel,
        out_shape=jax.ShapeDtypeStruct((B, L, Cout), jnp.float32),
        grid_spec=pltpu.PrefetchScalarGridSpec(
            num_scalar_prefetch=0,
            grid=(B,),
            in_specs=[pl.BlockSpec((1, L, Cin), lambda b: (b, 0, 0)),
                      pl.BlockSpec((Cin, Cout), lambda b: (0, 0)),
                      pl.BlockSpec((1, Cout), lambda b: (0, 0))],
            out_specs=pl.BlockSpec((1, L, Cout), lambda b: (b, 0, 0))),
        compiler_params=pltpu.CompilerParams(dimension_semantics=("parallel",)),
    )(x, w, b)


def gen_forward(z, params, seq_len):
    """z: (B, latent_dims). Returns (B, n_features+encoded_dim, seq_len) (NCL)."""
    B = z.shape[0]
    L0 = seq_len // 64
    h = lin0_relu(z, params["lin0_w"].T, params["lin0_b"][None, :])     # (B, 512*L0)
    # torch .view(-1, 512, L0) (NCL) -> channels-last (B, L0, 512)
    x = h.reshape(B, 512, L0).transpose(0, 2, 1)
    for name in ("gb1", "gb2", "gb3", "gbw1", "gbw2", "gbw3"):
        p = params[name]
        x = gblock(x,
                   p["convp_w"][:, :, 0], p["convp_b"][None, :],
                   jnp.transpose(p["convu_w"], (2, 0, 1)), p["convu_b"][None, :],
                   jnp.transpose(p["conv1_w"], (2, 0, 1)), p["conv1_b"][None, :])
    y = pointwise_tanh(x, params["convw_w"][:, :, 0], params["convw_b"][None, :])
    return jnp.transpose(y, (0, 2, 1))                                  # back to NCL


# --------------------------------------------------------------------------
# Parameters (PyTorch layouts) + pure-JAX reference of the PyTorch forward
# --------------------------------------------------------------------------
def init_params(key, latent_dims, seq_len, encoded_dim):
    L0 = seq_len // 64
    c_final = n_features + encoded_dim
    keys = iter(jax.random.split(key, 64))

    def unif(shape, fan_in):
        bound = 1.0 / (float(fan_in) ** 0.5)
        return jax.random.uniform(next(keys), shape, jnp.float32, -bound, bound)

    def gblock_params(cin, cout):
        return {
            "convp_w": unif((cin, cout, 1), cin), "convp_b": unif((cout,), cin),
            "convu_w": unif((cin, cout, 4), cin * 4), "convu_b": unif((cout,), cin * 4),
            "conv1_w": unif((cout, cout, 3), cout * 3), "conv1_b": unif((cout,), cout * 3),
        }

    params = {
        "lin0_w": unif((512 * L0, latent_dims), latent_dims),   # torch Linear (out, in)
        "lin0_b": unif((512 * L0,), latent_dims),
    }
    for name, (ci, co) in (("gb1", (512, 512)), ("gb2", (512, 512)), ("gb3", (512, 512)),
                           ("gbw1", (512, 256)), ("gbw2", (256, 128)), ("gbw3", (128, 64))):
        params[name] = gblock_params(ci, co)
    params["convw_w"] = unif((64, c_final, 1), 64)
    params["convw_b"] = unif((c_final,), 64)
    return params


_HI = jax.lax.Precision.HIGHEST


def _conv_transpose1d_ref(x, w, b, stride, padding):
    # x: (B, Cin, L), w: (Cin, Cout, K) — PyTorch ConvTranspose1d semantics.
    B, Cin, L = x.shape
    K = w.shape[2]
    Cout = w.shape[1]
    full_len = (L - 1) * stride + K
    y = jnp.zeros((B, Cout, full_len), x.dtype)
    for k in range(K):
        contrib = jnp.einsum("bil,io->bol", x, w[:, :, k], precision=_HI)
        y = y.at[:, :, k:k + (L - 1) * stride + 1:stride].add(contrib)
    Lout = (L - 1) * stride - 2 * padding + K
    return y[:, :, padding:padding + Lout] + b[None, :, None]


def _interp_linear_2x_ref(x):
    # F.interpolate(scale_factor=2, mode='linear', align_corners=False) on (B, C, L)
    L = x.shape[-1]
    j = jnp.arange(2 * L, dtype=jnp.float32)
    src = jnp.clip((j + 0.5) * 0.5 - 0.5, 0.0, None)
    i0 = jnp.clip(jnp.floor(src).astype(jnp.int32), 0, L - 1)
    i1 = jnp.minimum(i0 + 1, L - 1)
    lam = src - i0.astype(jnp.float32)
    return x[..., i0] * (1.0 - lam) + x[..., i1] * lam


def _instance_norm_ref(x):
    m = jnp.mean(x, axis=-1, keepdims=True)
    v = jnp.mean((x - m) ** 2, axis=-1, keepdims=True)
    return (x - m) / jnp.sqrt(v + _EPS)


def gen_reference(z, params, seq_len):
    B = z.shape[0]
    L0 = seq_len // 64
    h = jnp.maximum(jnp.dot(z, params["lin0_w"].T, precision=_HI) + params["lin0_b"], 0.0)
    x = h.reshape(B, 512, L0)
    for name in ("gb1", "gb2", "gb3", "gbw1", "gbw2", "gbw3"):
        p = params[name]
        y0 = _interp_linear_2x_ref(_conv_transpose1d_ref(x, p["convp_w"], p["convp_b"], 1, 0))
        y = jnp.maximum(_instance_norm_ref(_conv_transpose1d_ref(x, p["convu_w"], p["convu_b"], 2, 1)), 0.0)
        x = jnp.maximum(y0 + _instance_norm_ref(_conv_transpose1d_ref(y, p["conv1_w"], p["conv1_b"], 1, 1)), 0.0)
    x = _conv_transpose1d_ref(x, params["convw_w"], params["convw_b"], 1, 0)
    return jnp.tanh(x)


# --------------------------------------------------------------------------
if __name__ == "__main__":
    B = 2
    latent_dims = 16
    seq_len = 128          # must be a multiple of 64 (6 upsampling blocks)
    encoded_dim = 5        # output channels = n_features + encoded_dim = 8

    key = jax.random.PRNGKey(0)
    kp, kz = jax.random.split(key)
    params = init_params(kp, latent_dims, seq_len, encoded_dim)
    z = jax.random.normal(kz, (B, latent_dims), jnp.float32)

    out = gen_forward(z, params, seq_len)
    out = jax.block_until_ready(out)

    ref = gen_reference(z, params, seq_len)
    assert out.shape == (B, n_features + encoded_dim, seq_len), out.shape
    max_err = float(jnp.max(jnp.abs(out - ref)))
    assert bool(jnp.allclose(out, ref, atol=2e-2, rtol=2e-2)), max_err

    print("KERNEL_OK")
</pallas_src>

<mosaic_0001>
module attributes {stable_mosaic.version = 11 : i64} {
  func.func @_lin0_relu_kernel(%arg0: i32, %arg1: memref<2x16xf32, #tpu.memory_space<vmem>>, %arg2: memref<16x1024xf32, #tpu.memory_space<vmem>>, %arg3: memref<1x1024xf32, #tpu.memory_space<vmem>>, %arg4: memref<2x1024xf32, #tpu.memory_space<vmem>>) attributes {dimension_semantics = [#tpu.dimension_semantics<arbitrary>], iteration_bounds = array<i64: 1>, scalar_prefetch = 0 : i64, scratch_operands = 0 : i64, tpu.core_type = #tpu.core_type<tc>, window_params = [{pipeline_mode = #tpu.pipeline_mode<synchronous>, transform_indices = @transform_0, window_bounds = array<i64: 2, 16>}, {pipeline_mode = #tpu.pipeline_mode<synchronous>, transform_indices = @transform_1, window_bounds = array<i64: 16, 1024>}, {pipeline_mode = #tpu.pipeline_mode<synchronous>, transform_indices = @transform_2, window_bounds = array<i64: 1, 1024>}, {pipeline_mode = #tpu.pipeline_mode<synchronous>, transform_indices = @transform_3, window_bounds = array<i64: 2, 1024>}]} {
    %c0 = arith.constant 0 : index
    %c0_0 = arith.constant 0 : index
    %0 = vector.load %arg1[%c0, %c0_0] : memref<2x16xf32, #tpu.memory_space<vmem>>, vector<2x16xf32>
    %c0_1 = arith.constant 0 : index
    %c0_2 = arith.constant 0 : index
    %1 = vector.load %arg2[%c0_1, %c0_2] : memref<16x1024xf32, #tpu.memory_space<vmem>>, vector<16x1024xf32>
    %cst = arith.constant dense<0.000000e+00> : vector<2x1024xf32>
    %2 = tpu.matmul %0, %1, %cst {dimension_numbers = #tpu.dot_dimension_numbers<[1], [0], [0], [1], [0, 0, 1, 1], [], []>} : vector<2x16xf32>, vector<16x1024xf32>, vector<2x1024xf32> -> vector<2x1024xf32>
    %c0_3 = arith.constant 0 : index
    %c0_4 = arith.constant 0 : index
    %3 = vector.load %arg3[%c0_3, %c0_4] : memref<1x1024xf32, #tpu.memory_space<vmem>>, vector<1x1024xf32>
    %4 = vector.broadcast %3 : vector<1x1024xf32> to vector<2x1024xf32>
    %5 = arith.addf %2, %4 : vector<2x1024xf32>
    %cst_5 = arith.constant 0.000000e+00 : f32
    %6 = vector.broadcast %cst_5 : f32 to vector<2x1024xf32>
    %7 = arith.maximumf %5, %6 : vector<2x1024xf32>
    %c0_6 = arith.constant 0 : index
    %c0_7 = arith.constant 0 : index
    %8 = vector.load %arg4[%c0_6, %c0_7] : memref<2x1024xf32, #tpu.memory_space<vmem>>, vector<2x1024xf32>
    tpu.vector_store %arg4[%c0_6, %c0_7], %7 {strides = array<i32>} : memref<2x1024xf32, #tpu.memory_space<vmem>>, vector<2x1024xf32>,
    return
  }
  func.func @transform_0(%arg0: i32) -> (i32, i32) {
    %c0_i32 = arith.constant 0 : i32
    %c0_i32_0 = arith.constant 0 : i32
    %c0_i32_1 = arith.constant 0 : i32
    return %c0_i32, %c0_i32_0 : i32, i32
  }
  func.func @transform_1(%arg0: i32) -> (i32, i32) {
    %c0_i32 = arith.constant 0 : i32
    %c0_i32_0 = arith.constant 0 : i32
    %c0_i32_1 = arith.constant 0 : i32
    return %c0_i32, %c0_i32_0 : i32, i32
  }
  func.func @transform_2(%arg0: i32) -> (i32, i32) {
    %c0_i32 = arith.constant 0 : i32
    %c0_i32_0 = arith.constant 0 : i32
    %c0_i32_1 = arith.constant 0 : i32
    return %c0_i32, %c0_i32_0 : i32, i32
  }
  func.func @transform_3(%arg0: i32) -> (i32, i32) {
    %c0_i32 = arith.constant 0 : i32
    %c0_i32_0 = arith.constant 0 : i32
    %c0_i32_1 = arith.constant 0 : i32
    return %c0_i32, %c0_i32_0 : i32, i32
  }
}

</mosaic_0001>

<llo_original>
// kernel: tpu_custom_call.1
$region0: #{tpu_custom_call.1}
  #allocation0 [shape = 'u32[]', space=smem, size = 0x4, offset = 0x4, fixed_abs, tag = 'smem constant byte address 0x4 - core index']
  #allocation1 [shape = 'u32[144,128]{1,0:T(1,128)}', space=vmem, size = 0x12000, scoped, tag = 'internal scratch']
  %s0 = inlined_call_operand.hbm [shape: f32[2,16], index: 0, kind: input, shape index: {}]
  %s1 = inlined_call_operand.hbm [shape: f32[16,1024], index: 1, kind: input, shape index: {}]
  %s2 = inlined_call_operand.hbm [shape: f32[1,1024], index: 2, kind: input, shape index: {}]
  %s3 = inlined_call_operand.hbm [shape: f32[2,1024], index: 3, kind: output, shape index: {}]
  %s4 = sld [smem:[#allocation0]]
  $region34: #{tpu_custom_call.1} parent=0
    _
  %s6 = ssub.s32 1, %s4
  %s7 = scalar_select 0, %s6, %s4
  $region1: #{tpu_custom_call.1} parent=0
    #allocation2 [shape = 'u8[1024]{0}', space=vmem, size = 0x400, scoped, tag = 'input window, operand 0, single buffered']
    #allocation3 [shape = 's32[1]{0}', space=sflag, size = 0x4, scoped, tag = 'scoped memory for tpu_custom_call.1']
    #allocation4 [shape = 's32[1]{0}', space=sflag, size = 0x4, scoped, tag = 'scoped memory for tpu_custom_call.1']
    #allocation5 [shape = 'u8[65536]{0}', space=vmem, size = 0x10000, scoped, tag = 'input window, operand 1, single buffered']
    #allocation6 [shape = 's32[1]{0}', space=sflag, size = 0x4, scoped, tag = 'scoped memory for tpu_custom_call.1']
    #allocation7 [shape = 'u8[4096]{0}', space=vmem, size = 0x1000, scoped, tag = 'input window, operand 2, single buffered']
    #allocation8 [shape = 'u8[8192]{0}', space=vmem, size = 0x2000, scoped, tag = 'output window, operand 0, single buffered']
    %8 = vsyncpa [#allocation3], 0
    %9 = vsyncpa [#allocation6], 0
    %10 = vsyncpa [#allocation4], 0
    // Predicated region
    $region2: #{tpu_custom_call.1} parent=1 // pred_check
      _
    $region3: #{tpu_custom_call.1} parent=1 // pred_check_branch
      %12 = sbr.rel (0) target = $region5
    $region4: #{tpu_custom_call.1} parent=1 // pred_region
      %s14 = ssub.s32 32, 32
      %15 = vsyncadd [#allocation3], %s14
      %s17 = sshll.u32 [#allocation2], 4
      %s18 = int_to_ptr.vmem [resolvable:$true] %s17
      %20 = dma.hbm_to_vmem [thread:$0]  %s0, 32, %s18, [#allocation3]
    $region5: #{tpu_custom_call.1} parent=1 // pred_fallthru
      _
    // Predicated region
    $region6: #{tpu_custom_call.1} parent=1 // pred_check
      _
    $region7: #{tpu_custom_call.1} parent=1 // pred_check_branch
      %22 = sbr.rel (0) target = $region9
    $region8: #{tpu_custom_call.1} parent=1 // pred_region
      %s24 = ssub.s32 2048, 2048
      %25 = vsyncadd [#allocation6], %s24
      %s26 = sshll.u32 [#allocation5], 4
      %s27 = int_to_ptr.vmem [resolvable:$true] %s26
      %32 = dma.hbm_to_vmem [thread:$0]  %s1, 2048, %s27, [#allocation6], 1024, 1024, 64
    $region9: #{tpu_custom_call.1} parent=1 // pred_fallthru
      _
    // Predicated region
    $region10: #{tpu_custom_call.1} parent=1 // pred_check
      _
    $region11: #{tpu_custom_call.1} parent=1 // pred_check_branch
      %34 = sbr.rel (0) target = $region13
    $region12: #{tpu_custom_call.1} parent=1 // pred_region
      %s36 = ssub.s32 128, 128
      %37 = vsyncadd [#allocation6], %s36
      %s39 = sshll.u32 [#allocation7], 4
      %s40 = int_to_ptr.vmem [resolvable:$true] %s39
      %42 = dma.hbm_to_vmem [thread:$0]  %s2, 128, %s40, [#allocation6]
    $region13: #{tpu_custom_call.1} parent=1 // pred_fallthru
      _
    // Predicated region
    $region14: #{tpu_custom_call.1} parent=1 // pred_check
      _
    $region15: #{tpu_custom_call.1} parent=1 // pred_check_branch
      %44 = sbr.rel (0) target = $region17
    $region16: #{tpu_custom_call.1} parent=1 // pred_region
      %45 = dma.done [#allocation3], 32
    $region17: #{tpu_custom_call.1} parent=1 // pred_fallthru
      _
    // Predicated region
    $region18: #{tpu_custom_call.1} parent=1 // pred_check
      _
    $region19: #{tpu_custom_call.1} parent=1 // pred_check_branch
      %47 = sbr.rel (0) target = $region21
    $region20: #{tpu_custom_call.1} parent=1 // pred_region
      %48 = dma.done [#allocation6], 2048
    $region21: #{tpu_custom_call.1} parent=1 // pred_fallthru
      _
    // Predicated region
    $region22: #{tpu_custom_call.1} parent=1 // pred_check
      _
    $region23: #{tpu_custom_call.1} parent=1 // pred_check_branch
      %50 = sbr.rel (0) target = $region25
    $region24: #{tpu_custom_call.1} parent=1 // pred_region
      %51 = dma.done [#allocation6], 128
    $region25: #{tpu_custom_call.1} parent=1 // pred_fallthru
      _
    %v52 = vld [vmem:[#allocation2] sm:$0x3]
    %v53 = vld [vmem:[#allocation5] sm:$0xff]
    %v54 = vld [vmem:[#allocation5 + $0x8] sm:$0xff]
    %v55 = vld [vmem:[#allocation5 + $0x10] sm:$0xff]
    %v56 = vld [vmem:[#allocation5 + $0x18] sm:$0xff]
    %v57 = vld [vmem:[#allocation5 + $0x20] sm:$0xff]
    %v58 = vld [vmem:[#allocation5 + $0x28] sm:$0xff]
    %v59 = vld [vmem:[#allocation5 + $0x30] sm:$0xff]
    %v60 = vld [vmem:[#allocation5 + $0x38] sm:$0xff]
    %v61 = vld [vmem:[#allocation5 + $0x40] sm:$0xff]
    %v62 = vld [vmem:[#allocation5 + $0x48] sm:$0xff]
    %v63 = vld [vmem:[#allocation5 + $0x50] sm:$0xff]
    %v64 = vld [vmem:[#allocation5 + $0x58] sm:$0xff]
    %v65 = vld [vmem:[#allocation5 + $0x60] sm:$0xff]
    %v66 = vld [vmem:[#allocation5 + $0x68] sm:$0xff]
    %v67 = vld [vmem:[#allocation5 + $0x70] sm:$0xff]
    %v68 = vld [vmem:[#allocation5 + $0x78] sm:$0xff]
    %v69 = vld [vmem:[#allocation7] sm:$0xff]
    %v71 = vlaneseq
    %v72 = vshrl.u32 %v71, 7
    %v73 = vsub.s32 0, %v72
    %v74 = vrot.slane %v69, %v73
    %v75 = vlaneseq
    %v76 = vshrl.u32 %v75, 7
    %v77 = vsub.s32 1, %v76
    %v78 = vrot.slane %v69, %v77
    %v79 = vlaneseq
    %v80 = vshrl.u32 %v79, 7
    %v81 = vsub.s32 2, %v80
    %v82 = vrot.slane %v69, %v81
    %v83 = vlaneseq
    %v84 = vshrl.u32 %v83, 7
    %v85 = vsub.s32 3, %v84
    %v86 = vrot.slane %v69, %v85
    %v87 = vlaneseq
    %v88 = vshrl.u32 %v87, 7
    %v89 = vsub.s32 4, %v88
    %v90 = vrot.slane %v69, %v89
    %v91 = vlaneseq
    %v92 = vshrl.u32 %v91, 7
    %v93 = vsub.s32 5, %v92
    %v94 = vrot.slane %v69, %v93
    %v95 = vlaneseq
    %v96 = vshrl.u32 %v95, 7
    %v97 = vsub.s32 6, %v96
    %v98 = vrot.slane %v69, %v97
    %v99 = vlaneseq
    %v100 = vshrl.u32 %v99, 7
    %v101 = vsub.s32 7, %v100
    %v102 = vrot.slane %v69, %v101
    %vm111 = vcmask 130048
    %v113 = vsel %vm111, %v52, 0
    %115 = vmatprep.subr.mxu0 %v54
    %116 = vmatpush1.msra.mxu0 %v53
    %117 = vmatprep.subr.mxu0 %v62
    %118 = vmatpush1.msra.mxu0 %v61
    %119 = vmatprep.subr.mxu0 0.0
    %120 = vmatpush1.msra.mxu0 0.0
    %121 = vmatprep.subr.mxu0 0.0
    %122 = vmatpush1.msra.mxu0 0.0
    %123 = vmatprep.subr.mxu0 0.0
    %124 = vmatpush1.msra.mxu0 0.0
    %125 = vmatprep.subr.mxu0 0.0
    %126 = vmatpush1.msra.mxu0 0.0
    %127 = vmatprep.subr.mxu0 0.0
    %128 = vmatpush1.msra.mxu0 0.0
    %129 = vmatprep.subr.mxu0 0.0
    %130 = vmatpush1.msra.mxu0 0.0
    %131 = vmatprep.subr.mxu0 0.0
    %132 = vmatpush1.msra.mxu0 0.0
    %133 = vmatprep.subr.mxu0 0.0
    %134 = vmatpush1.msra.mxu0 0.0
    %135 = vmatprep.subr.mxu0 0.0
    %136 = vmatpush1.msra.mxu0 0.0
    %137 = vmatprep.subr.mxu0 0.0
    %138 = vmatpush1.msra.mxu0 0.0
    %139 = vmatprep.subr.mxu0 0.0
    %140 = vmatpush1.msra.mxu0 0.0
    %141 = vmatprep.subr.mxu0 0.0
    %142 = vmatpush1.msra.mxu0 0.0
    %143 = vmatprep.subr.mxu0 0.0
    %144 = vmatpush1.msra.mxu0 0.0
    %145 = vmatprep.subr.mxu0 0.0
    %146 = vmatpush1.msra.mxu0 0.0
    %147 = vmatprep.subr.mxu0 0.0
    %148 = vmatpush1.msra.mxu0 0.0
    %149 = vmatprep.subr.mxu0 0.0
    %150 = vmatpush1.msra.mxu0 0.0
    %151 = vmatprep.subr.mxu0 0.0
    %152 = vmatpush1.msra.mxu0 0.0
    %153 = vmatprep.subr.mxu0 0.0
    %154 = vmatpush1.msra.mxu0 0.0
    %155 = vmatprep.subr.mxu0 0.0
    %156 = vmatpush1.msra.mxu0 0.0
    %157 = vmatprep.subr.mxu0 0.0
    %158 = vmatpush1.msra.mxu0 0.0
    %159 = vmatprep.subr.mxu0 0.0
    %160 = vmatpush1.msra.mxu0 0.0
    %161 = vmatprep.subr.mxu0 0.0
    %162 = vmatpush1.msra.mxu0 0.0
    %163 = vmatprep.subr.mxu0 0.0
    %164 = vmatpush1.msra.mxu0 0.0
    %165 = vmatprep.subr.mxu0 0.0
    %166 = vmatpush1.msra.mxu0 0.0
    %167 = vmatprep.subr.mxu0 0.0
    %168 = vmatpush1.msra.mxu0 0.0
    %169 = vmatprep.subr.mxu0 0.0
    %170 = vmatpush1.msra.mxu0 0.0
    %171 = vmatprep.subr.mxu0 0.0
    %172 = vmatpush1.msra.mxu0 0.0
    %173 = vmatprep.subr.mxu0 0.0
    %174 = vmatpush1.msra.mxu0 0.0
    %175 = vmatprep.subr.mxu0 0.0
    %176 = vmatpush1.msra.mxu0 0.0
    %177 = vmatprep.subr.mxu0 0.0
    %178 = vmatpush1.msra.mxu0 0.0
    %179 = vmatprep.mubr.f32.mxu0 0.0
    %180 = vmatmul.mubr.f32.gmra.mrb[0].mxu0 %v113
    %v181 = vpop.f32.mrb[0].mxu0
    %v182 = vadd.f32 %v74, %v181
    %v183 = vpop.f32.mrb[0].mxu0
    %v184 = vadd.f32 %v78, %v183
    %185 = vdwg.mxu0
    %186 = vmatprep.subr.mxu0 %v56
    %187 = vmatpush1.msra.mxu0 %v55
    %188 = vmatprep.subr.mxu0 %v64
    %189 = vmatpush1.msra.mxu0 %v63
    %190 = vmatprep.subr.mxu0 0.0
    %191 = vmatpush1.msra.mxu0 0.0
    %192 = vmatprep.subr.mxu0 0.0
    %193 = vmatpush1.msra.mxu0 0.0
    %194 = vmatprep.subr.mxu0 0.0
    %195 = vmatpush1.msra.mxu0 0.0
    %196 = vmatprep.subr.mxu0 0.0
    %197 = vmatpush1.msra.mxu0 0.0
    %198 = vmatprep.subr.mxu0 0.0
    %199 = vmatpush1.msra.mxu0 0.0
    %200 = vmatprep.subr.mxu0 0.0
    %201 = vmatpush1.msra.mxu0 0.0
    %202 = vmatprep.subr.mxu0 0.0
    %203 = vmatpush1.msra.mxu0 0.0
    %204 = vmatprep.subr.mxu0 0.0
    %205 = vmatpush1.msra.mxu0 0.0
    %206 = vmatprep.subr.mxu0 0.0
    %207 = vmatpush1.msra.mxu0 0.0
    %208 = vmatprep.subr.mxu0 0.0
    %209 = vmatpush1.msra.mxu0 0.0
    %210 = vmatprep.subr.mxu0 0.0
    %211 = vmatpush1.msra.mxu0 0.0
    %212 = vmatprep.subr.mxu0 0.0
    %213 = vmatpush1.msra.mxu0 0.0
    %214 = vmatprep.subr.mxu0 0.0
    %215 = vmatpush1.msra.mxu0 0.0
    %216 = vmatprep.subr.mxu0 0.0
    %217 = vmatpush1.msra.mxu0 0.0
    %218 = vmatprep.subr.mxu0 0.0
    %219 = vmatpush1.msra.mxu0 0.0
    %220 = vmatprep.subr.mxu0 0.0
    %221 = vmatpush1.msra.mxu0 0.0
    %222 = vmatprep.subr.mxu0 0.0
    %223 = vmatpush1.msra.mxu0 0.0
    %224 = vmatprep.subr.mxu0 0.0
    %225 = vmatpush1.msra.mxu0 0.0
    %226 = vmatprep.subr.mxu0 0.0
    %227 = vmatpush1.msra.mxu0 0.0
    %228 = vmatprep.subr.mxu0 0.0
    %229 = vmatpush1.msra.mxu0 0.0
    %230 = vmatprep.subr.mxu0 0.0
    %231 = vmatpush1.msra.mxu0 0.0
    %232 = vmatprep.subr.mxu0 0.0
    %233 = vmatpush1.msra.mxu0 0.0
    %234 = vmatprep.subr.mxu0 0.0
    %235 = vmatpush1.msra.mxu0 0.0
    %236 = vmatprep.subr.mxu0 0.0
    %237 = vmatpush1.msra.mxu0 0.0
    %238 = vmatprep.subr.mxu0 0.0
    %239 = vmatpush1.msra.mxu0 0.0
    %240 = vmatprep.subr.mxu0 0.0
    %241 = vmatpush1.msra.mxu0 0.0
    %242 = vmatprep.subr.mxu0 0.0
    %243 = vmatpush1.msra.mxu0 0.0
    %244 = vmatprep.subr.mxu0 0.0
    %245 = vmatpush1.msra.mxu0 0.0
    %246 = vmatprep.subr.mxu0 0.0
    %247 = vmatpush1.msra.mxu0 0.0
    %248 = vmatprep.subr.mxu0 0.0
    %249 = vmatpush1.msra.mxu0 0.0
    %250 = vmatprep.mubr.f32.mxu0 0.0
    %251 = vmatmul.mubr.f32.gmra.mrb[0].mxu0 %v113
    %v252 = vpop.f32.mrb[0].mxu0
    %v253 = vadd.f32 %v82, %v252
    %v254 = vpop.f32.mrb[0].mxu0
    %v255 = vadd.f32 %v86, %v254
    %256 = vdwg.mxu0
    %257 = vmatprep.subr.mxu0 %v58
    %258 = vmatpush1.msra.mxu0 %v57
    %259 = vmatprep.subr.mxu0 %v66
    %260 = vmatpush1.msra.mxu0 %v65
    %261 = vmatprep.subr.mxu0 0.0
    %262 = vmatpush1.msra.mxu0 0.0
    %263 = vmatprep.subr.mxu0 0.0
    %264 = vmatpush1.msra.mxu0 0.0
    %265 = vmatprep.subr.mxu0 0.0
    %266 = vmatpush1.msra.mxu0 0.0
    %267 = vmatprep.subr.mxu0 0.0
    %268 = vmatpush1.msra.mxu0 0.0
    %269 = vmatprep.subr.mxu0 0.0
    %270 = vmatpush1.msra.mxu0 0.0
    %271 = vmatprep.subr.mxu0 0.0
    %272 = vmatpush1.msra.mxu0 0.0
    %273 = vmatprep.subr.mxu0 0.0
    %274 = vmatpush1.msra.mxu0 0.0
    %275 = vmatprep.subr.mxu0 0.0
    %276 = vmatpush1.msra.mxu0 0.0
    %277 = vmatprep.subr.mxu0 0.0
    %278 = vmatpush1.msra.mxu0 0.0
    %279 = vmatprep.subr.mxu0 0.0
    %280 = vmatpush1.msra.mxu0 0.0
    %281 = vmatprep.subr.mxu0 0.0
    %282 = vmatpush1.msra.mxu0 0.0
    %283 = vmatprep.subr.mxu0 0.0
    %284 = vmatpush1.msra.mxu0 0.0
    %285 = vmatprep.subr.mxu0 0.0
    %286 = vmatpush1.msra.mxu0 0.0
    %287 = vmatprep.subr.mxu0 0.0
    %288 = vmatpush1.msra.mxu0 0.0
    %289 = vmatprep.subr.mxu0 0.0
    %290 = vmatpush1.msra.mxu0 0.0
    %291 = vmatprep.subr.mxu0 0.0
    %292 = vmatpush1.msra.mxu0 0.0
    %293 = vmatprep.subr.mxu0 0.0
    %294 = vmatpush1.msra.mxu0 0.0
    %295 = vmatprep.subr.mxu0 0.0
    %296 = vmatpush1.msra.mxu0 0.0
    %297 = vmatprep.subr.mxu0 0.0
    %298 = vmatpush1.msra.mxu0 0.0
    %299 = vmatprep.subr.mxu0 0.0
    %300 = vmatpush1.msra.mxu0 0.0
    %301 = vmatprep.subr.mxu0 0.0
    %302 = vmatpush1.msra.mxu0 0.0
    %303 = vmatprep.subr.mxu0 0.0
    %304 = vmatpush1.msra.mxu0 0.0
    %305 = vmatprep.subr.mxu0 0.0
    %306 = vmatpush1.msra.mxu0 0.0
    %307 = vmatprep.subr.mxu0 0.0
    %308 = vmatpush1.msra.mxu0 0.0
    %309 = vmatprep.subr.mxu0 0.0
    %310 = vmatpush1.msra.mxu0 0.0
    %311 = vmatprep.subr.mxu0 0.0
    %312 = vmatpush1.msra.mxu0 0.0
    %313 = vmatprep.subr.mxu0 0.0
    %314 = vmatpush1.msra.mxu0 0.0
    %315 = vmatprep.subr.mxu0 0.0
    %316 = vmatpush1.msra.mxu0 0.0
    %317 = vmatprep.subr.mxu0 0.0
    %318 = vmatpush1.msra.mxu0 0.0
    %319 = vmatprep.subr.mxu0 0.0
    %320 = vmatpush1.msra.mxu0 0.0
    %321 = vmatprep.mubr.f32.mxu0 0.0
    %322 = vmatmul.mubr.f32.gmra.mrb[0].mxu0 %v113
    %v323 = vpop.f32.mrb[0].mxu0
    %v324 = vadd.f32 %v90, %v323
    %v325 = vpop.f32.mrb[0].mxu0
    %v326 = vadd.f32 %v94, %v325
    %327 = vdwg.mxu0
    %328 = vmatprep.subr.mxu0 %v60
    %329 = vmatpush1.msra.mxu0 %v59
    %330 = vmatprep.subr.mxu0 %v68
    %331 = vmatpush1.msra.mxu0 %v67
    %332 = vmatprep.subr.mxu0 0.0
    %333 = vmatpush1.msra.mxu0 0.0
    %334 = vmatprep.subr.mxu0 0.0
    %335 = vmatpush1.msra.mxu0 0.0
    %336 = vmatprep.subr.mxu0 0.0
    %337 = vmatpush1.msra.mxu0 0.0
    %338 = vmatprep.subr.mxu0 0.0
    %339 = vmatpush1.msra.mxu0 0.0
    %340 = vmatprep.subr.mxu0 0.0
    %341 = vmatpush1.msra.mxu0 0.0
    %342 = vmatprep.subr.mxu0 0.0
    %343 = vmatpush1.msra.mxu0 0.0
    %344 = vmatprep.subr.mxu0 0.0
    %345 = vmatpush1.msra.mxu0 0.0
    %346 = vmatprep.subr.mxu0 0.0
    %347 = vmatpush1.msra.mxu0 0.0
    %348 = vmatprep.subr.mxu0 0.0
    %349 = vmatpush1.msra.mxu0 0.0
    %350 = vmatprep.subr.mxu0 0.0
    %351 = vmatpush1.msra.mxu0 0.0
    %352 = vmatprep.subr.mxu0 0.0
    %353 = vmatpush1.msra.mxu0 0.0
    %354 = vmatprep.subr.mxu0 0.0
    %355 = vmatpush1.msra.mxu0 0.0
    %356 = vmatprep.subr.mxu0 0.0
    %357 = vmatpush1.msra.mxu0 0.0
    %358 = vmatprep.subr.mxu0 0.0
    %359 = vmatpush1.msra.mxu0 0.0
    %360 = vmatprep.subr.mxu0 0.0
    %361 = vmatpush1.msra.mxu0 0.0
    %362 = vmatprep.subr.mxu0 0.0
    %363 = vmatpush1.msra.mxu0 0.0
    %364 = vmatprep.subr.mxu0 0.0
    %365 = vmatpush1.msra.mxu0 0.0
    %366 = vmatprep.subr.mxu0 0.0
    %367 = vmatpush1.msra.mxu0 0.0
    %368 = vmatprep.subr.mxu0 0.0
    %369 = vmatpush1.msra.mxu0 0.0
    %370 = vmatprep.subr.mxu0 0.0
    %371 = vmatpush1.msra.mxu0 0.0
    %372 = vmatprep.subr.mxu0 0.0
    %373 = vmatpush1.msra.mxu0 0.0
    %374 = vmatprep.subr.mxu0 0.0
    %375 = vmatpush1.msra.mxu0 0.0
    %376 = vmatprep.subr.mxu0 0.0
    %377 = vmatpush1.msra.mxu0 0.0
    %378 = vmatprep.subr.mxu0 0.0
    %379 = vmatpush1.msra.mxu0 0.0
    %380 = vmatprep.subr.mxu0 0.0
    %381 = vmatpush1.msra.mxu0 0.0
    %382 = vmatprep.subr.mxu0 0.0
    %383 = vmatpush1.msra.mxu0 0.0
    %384 = vmatprep.subr.mxu0 0.0
    %385 = vmatpush1.msra.mxu0 0.0
    %386 = vmatprep.subr.mxu0 0.0
    %387 = vmatpush1.msra.mxu0 0.0
    %388 = vmatprep.subr.mxu0 0.0
    %389 = vmatpush1.msra.mxu0 0.0
    %390 = vmatprep.subr.mxu0 0.0
    %391 = vmatpush1.msra.mxu0 0.0
    %392 = vmatprep.mubr.f32.mxu0 0.0
    %393 = vmatmul.mubr.f32.gmra.mrb[0].mxu0 %v113
    %v394 = vpop.f32.mrb[0].mxu0
    %v395 = vadd.f32 %v98, %v394
    %v396 = vpop.f32.mrb[0].mxu0
    %v397 = vadd.f32 %v102, %v396
    %398 = vdwg.mxu0
    %v399 = vmax.f32 %v182, 0.0
    %v400 = vmax.f32 %v184, 0.0
    %v401 = vmax.f32 %v253, 0.0
    %v402 = vmax.f32 %v255, 0.0
    %v403 = vmax.f32 %v324, 0.0
    %v404 = vmax.f32 %v326, 0.0
    %v405 = vmax.f32 %v395, 0.0
    %v406 = vmax.f32 %v397, 0.0
    %v415 = vcombine.low %v399, %v400
    %v416 = vcombine.low %v401, %v402
    %v418 = vunpack.c.l.s4 1983009808
    %v419 = vunpack.c.0.s8 %v418
    %v420 = vlaneseq
    %v421 = vshrl.u32 %v420, 7
    %v422 = vsub.s32 %v419, %v421
    %v423 = vrot.slane %v415, %v422
    %v425 = vunpack.c.l.s4 1983009808
    %v426 = vunpack.c.0.s8 %v425
    %v427 = vlaneseq
    %v428 = vshrl.u32 %v427, 7
    %v429 = vsub.s32 %v426, %v428
    %v430 = vrot.slane %v416, %v429
    %v431 = vcombine.low %v423, %v430
    %v432 = vcombine.low %v403, %v404
    %v433 = vcombine.low %v405, %v406
    %v435 = vunpack.c.l.s4 1983009808
    %v436 = vunpack.c.0.s8 %v435
    %v437 = vlaneseq
    %v438 = vshrl.u32 %v437, 7
    %v439 = vsub.s32 %v436, %v438
    %v440 = vrot.slane %v432, %v439
    %v442 = vunpack.c.l.s4 1983009808
    %v443 = vunpack.c.0.s8 %v442
    %v444 = vlaneseq
    %v445 = vshrl.u32 %v444, 7
    %v446 = vsub.s32 %v443, %v445
    %v447 = vrot.slane %v433, %v446
    %v448 = vcombine.low %v440, %v447
    %451 = vst [vmem:[#allocation8] sm:$0xff] %v431
    %452 = vst [vmem:[#allocation8 + $0x8] sm:$0xff] %v448
    // Predicated region
    $region26: #{tpu_custom_call.1} parent=1 // pred_check
      _
    $region27: #{tpu_custom_call.1} parent=1 // pred_check_branch
      %454 = sbr.rel (0) target = $region29
    $region28: #{tpu_custom_call.1} parent=1 // pred_region
      %s456 = ssub.s32 256, 256
      %457 = vsyncadd [#allocation4], %s456
      %s459 = sshll.u32 [#allocation8], 4
      %s460 = int_to_ptr.vmem [resolvable:$true] %s459
      %462 = dma.vmem_to_hbm [thread:$0]  %s460, 256, %s3, [#allocation4]
    $region29: #{tpu_custom_call.1} parent=1 // pred_fallthru
      _
    // Predicated region
    $region30: #{tpu_custom_call.1} parent=1 // pred_check
      _
    $region31: #{tpu_custom_call.1} parent=1 // pred_check_branch
      %464 = sbr.rel (0) target = $region33
    $region32: #{tpu_custom_call.1} parent=1 // pred_region
      %465 = dma.done [#allocation4], 256
    $region33: #{tpu_custom_call.1} parent=1 // pred_fallthru
      _
    %466 = vsyncpa [#allocation3], 1
    %467 = vsyncpa [#allocation6], 1
    %468 = vsyncpa [#allocation4], 1

</llo_original>
